<compile_context>
chip_gen: v7x
topology: tpu7x:2x2x1
jax: 0.10.0
libtpu: 0.0.40
codegen_flags: <defaults>
</compile_context>

<pallas_src>
from typing import Tuple

import jax
import jax.numpy as jnp
from jax.experimental import pallas as pl
from jax.experimental.pallas import tpu as pltpu


def _linear_kernel(x_ref, w_ref, b_ref, o_ref):
    """o[i, j] = sum_k x[i, k] @ w[k, j] + b[j], accumulated over the K axis."""
    k = pl.program_id(2)

    @pl.when(k == 0)
    def _():
        # Fold the bias into the accumulator init (f32 epilogue, v5e-safe).
        o_ref[...] = jnp.broadcast_to(b_ref[...], o_ref.shape).astype(o_ref.dtype)

    # bf16 x / w into the MXU, f32 accumulation into the resident output block.
    o_ref[...] += jnp.dot(
        x_ref[...], w_ref[...], preferred_element_type=jnp.float32
    )


def _round_up(x: int, m: int) -> int:
    return ((x + m - 1) // m) * m


def pallas_linear(
    x: jax.Array,
    w: jax.Array,
    b: jax.Array,
    *,
    compute_dtype=jnp.bfloat16,
    tm_max: int = 256,
    tn_max: int = 512,
    tk_max: int = 1024,
) -> jax.Array:
    """x: (B, K), w: (K, N), b: (N,) -> (B, N) f32 via a Pallas TPU kernel."""
    B, K = x.shape
    Kw, N = w.shape
    assert K == Kw, (K, Kw)

    # Tile sizes: (8, 128)-granular, capped so double-buffered tiles stay well
    # inside scoped VMEM even on v7x (64 MiB physical).
    tm = min(_round_up(B, 8), tm_max)
    tn = min(_round_up(N, 128), tn_max)
    tk = min(_round_up(K, 128), tk_max)

    Bp = _round_up(B, tm)
    Kp = _round_up(K, tk)
    Np = _round_up(N, tn)

    xp = x if (Bp, Kp) == (B, K) else jnp.pad(x, ((0, Bp - B), (0, Kp - K)))
    wp = w if (Kp, Np) == (K, N) else jnp.pad(w, ((0, Kp - K), (0, Np - N)))
    bp = b.reshape(1, N)
    if Np != N:
        bp = jnp.pad(bp, ((0, 0), (0, Np - N)))

    xp = xp.astype(compute_dtype)
    wp = wp.astype(compute_dtype)
    bp = bp.astype(jnp.float32)

    out = pl.pallas_call(
        _linear_kernel,
        out_shape=jax.ShapeDtypeStruct((Bp, Np), jnp.float32),
        grid_spec=pltpu.PrefetchScalarGridSpec(
            num_scalar_prefetch=0,
            grid=(Bp // tm, Np // tn, Kp // tk),
            in_specs=[
                pl.BlockSpec((tm, tk), lambda i, j, k: (i, k)),
                pl.BlockSpec((tk, tn), lambda i, j, k: (k, j)),
                pl.BlockSpec((1, tn), lambda i, j, k: (0, j)),
            ],
            out_specs=pl.BlockSpec((tm, tn), lambda i, j, k: (i, j)),
        ),
        compiler_params=pltpu.CompilerParams(
            dimension_semantics=("parallel", "parallel", "arbitrary"),
            vmem_limit_bytes=32 * 1024 * 1024,
        ),
    )(xp, wp, bp)

    if (Bp, Np) != (B, N):
        out = out[:B, :N]
    return out


class EncoderDecoder:
    """JAX/Pallas port of the abstract EncoderDecoder, realized as a linear AE."""

    name = "EncoderDecoder_pallas_linear"

    def __init__(self, state_shape: Tuple[int, ...], latent_dim: int, key) -> None:
        self.state_shape = tuple(state_shape)
        self.latent_dim = int(latent_dim)
        self.state_dim = 1
        for s in self.state_shape:
            self.state_dim *= s

        k_ew, k_eb, k_dw, k_db = jax.random.split(key, 4)
        scale_e = 1.0 / jnp.sqrt(self.state_dim)
        scale_d = 1.0 / jnp.sqrt(self.latent_dim)
        # encoder: (state_dim, latent_dim); decoder: (latent_dim, state_dim)
        # (i.e. x @ W + b; decode weights are the transpose of torch nn.Linear)
        self.w_enc = (jax.random.normal(k_ew, (self.state_dim, self.latent_dim),
                                        jnp.float32) * scale_e)
        self.b_enc = (jax.random.normal(k_eb, (self.latent_dim,), jnp.float32)
                      * scale_e)
        self.w_dec = (jax.random.normal(k_dw, (self.latent_dim, self.state_dim),
                                        jnp.float32) * scale_d)
        self.b_dec = (jax.random.normal(k_db, (self.state_dim,), jnp.float32)
                      * scale_d)

    @classmethod
    def calculate_latent_dim(cls, state_shape: Tuple[int, ...], **kwargs) -> int:
        return int(kwargs.get("latent_dim", 32))

    def encode(self, x: jax.Array, **kwargs) -> jax.Array:
        # x: (..., *state_shape) -> (..., latent_dim)
        lead = x.shape[: x.ndim - len(self.state_shape)]
        xf = x.reshape((-1, self.state_dim)).astype(jnp.float32)
        z = pallas_linear(xf, self.w_enc, self.b_enc)
        return z.reshape(lead + (self.latent_dim,))

    def decode(self, z: jax.Array, **kwargs) -> jax.Array:
        # z: (..., latent_dim) -> (..., *state_shape)
        lead = z.shape[:-1]
        zf = z.reshape((-1, self.latent_dim)).astype(jnp.float32)
        x = pallas_linear(zf, self.w_dec, self.b_dec)
        return x.reshape(lead + self.state_shape)

    def forward(self, xz: jax.Array, operation: str = "encode", **kwargs):
        if operation == "encode":
            return self.encode(xz, **kwargs)
        elif operation == "decode":
            return self.decode(xz, **kwargs)
        else:
            raise NotImplementedError

    __call__ = forward


if __name__ == "__main__":
    key = jax.random.PRNGKey(0)
    k_params, k_x = jax.random.split(key)

    B, C, H, W = 2, 4, 16, 16          # NCHW, state_shape = (4, 16, 16)
    latent_dim = 32
    model = EncoderDecoder((C, H, W), latent_dim, k_params)

    x = jax.random.normal(k_x, (B, C, H, W), jnp.float32)

    # encode path
    z = model(x, operation="encode")
    z = jax.block_until_ready(z)
    assert z.shape == (B, latent_dim), z.shape

    # decode path
    x_rec = model(z, operation="decode")
    x_rec = jax.block_until_ready(x_rec)
    assert x_rec.shape == (B, C, H, W), x_rec.shape

    # correctness check against a plain-JAX reference using the same bf16
    # operand / f32-accumulation recipe as the kernel.
    def ref_linear(a, w, b):
        return jnp.dot(a.astype(jnp.bfloat16), w.astype(jnp.bfloat16),
                       preferred_element_type=jnp.float32) + b

    z_ref = ref_linear(x.reshape(B, -1), model.w_enc, model.b_enc)
    x_ref = ref_linear(z, model.w_dec, model.b_dec).reshape(B, C, H, W)
    assert jnp.allclose(z, z_ref, atol=2e-3, rtol=2e-3), \
        float(jnp.max(jnp.abs(z - z_ref)))
    assert jnp.allclose(x_rec, x_ref, atol=2e-3, rtol=2e-3), \
        float(jnp.max(jnp.abs(x_rec - x_ref)))

    print("KERNEL_OK")
</pallas_src>

<mosaic_0001>
module attributes {stable_mosaic.version = 11 : i64} {
  func.func @_linear_kernel(%arg0: i32, %arg1: i32, %arg2: i32, %arg3: memref<8x1024xbf16, #tpu.memory_space<vmem>>, %arg4: memref<1024x128xbf16, #tpu.memory_space<vmem>>, %arg5: memref<1x128xf32, #tpu.memory_space<vmem>>, %arg6: memref<8x128xf32, #tpu.memory_space<vmem>>) attributes {dimension_semantics = [#tpu.dimension_semantics<parallel>, #tpu.dimension_semantics<parallel>, #tpu.dimension_semantics<arbitrary>], iteration_bounds = array<i64: 1, 1, 1>, scalar_prefetch = 0 : i64, scratch_operands = 0 : i64, tpu.core_type = #tpu.core_type<tc>, window_params = [{transform_indices = @transform_0, window_bounds = array<i64: 8, 1024>}, {transform_indices = @transform_1, window_bounds = array<i64: 1024, 128>}, {transform_indices = @transform_2, window_bounds = array<i64: 1, 128>}, {transform_indices = @transform_3, window_bounds = array<i64: 8, 128>}]} {
    %c0_i32 = arith.constant 0 : i32
    %0 = arith.cmpi eq, %arg2, %c0_i32 : i32
    %1 = arith.extui %0 : i1 to i32
    %c0_i32_0 = arith.constant 0 : i32
    %2 = arith.cmpi ne, %1, %c0_i32_0 : i32
    scf.if %2 {
      %c0_8 = arith.constant 0 : index
      %c0_9 = arith.constant 0 : index
      %9 = vector.load %arg5[%c0_8, %c0_9] : memref<1x128xf32, #tpu.memory_space<vmem>>, vector<1x128xf32>
      %10 = vector.shape_cast %9 : vector<1x128xf32> to vector<1x128xf32>
      %11 = vector.broadcast %10 : vector<1x128xf32> to vector<8x128xf32>
      %c0_10 = arith.constant 0 : index
      %c0_11 = arith.constant 0 : index
      %12 = vector.load %arg6[%c0_10, %c0_11] : memref<8x128xf32, #tpu.memory_space<vmem>>, vector<8x128xf32>
      tpu.vector_store %arg6[%c0_10, %c0_11], %11 {strides = array<i32>} : memref<8x128xf32, #tpu.memory_space<vmem>>, vector<8x128xf32>,
    } else {
    }
    %c0 = arith.constant 0 : index
    %c0_1 = arith.constant 0 : index
    %3 = vector.load %arg6[%c0, %c0_1] : memref<8x128xf32, #tpu.memory_space<vmem>>, vector<8x128xf32>
    %c0_2 = arith.constant 0 : index
    %c0_3 = arith.constant 0 : index
    %4 = vector.load %arg3[%c0_2, %c0_3] : memref<8x1024xbf16, #tpu.memory_space<vmem>>, vector<8x1024xbf16>
    %c0_4 = arith.constant 0 : index
    %c0_5 = arith.constant 0 : index
    %5 = vector.load %arg4[%c0_4, %c0_5] : memref<1024x128xbf16, #tpu.memory_space<vmem>>, vector<1024x128xbf16>
    %cst = arith.constant dense<0.000000e+00> : vector<8x128xf32>
    %6 = tpu.matmul %4, %5, %cst {dimension_numbers = #tpu.dot_dimension_numbers<[1], [0], [0], [1], [0, 0, 1, 1], [], []>} : vector<8x1024xbf16>, vector<1024x128xbf16>, vector<8x128xf32> -> vector<8x128xf32>
    %7 = arith.addf %3, %6 : vector<8x128xf32>
    %c0_6 = arith.constant 0 : index
    %c0_7 = arith.constant 0 : index
    %8 = vector.load %arg6[%c0_6, %c0_7] : memref<8x128xf32, #tpu.memory_space<vmem>>, vector<8x128xf32>
    tpu.vector_store %arg6[%c0_6, %c0_7], %7 {strides = array<i32>} : memref<8x128xf32, #tpu.memory_space<vmem>>, vector<8x128xf32>,
    return
  }
  func.func @transform_0(%arg0: i32, %arg1: i32, %arg2: i32) -> (i32, i32) {
    %c0_i32 = arith.constant 0 : i32
    return %arg0, %arg2 : i32, i32
  }
  func.func @transform_1(%arg0: i32, %arg1: i32, %arg2: i32) -> (i32, i32) {
    %c0_i32 = arith.constant 0 : i32
    return %arg2, %arg1 : i32, i32
  }
  func.func @transform_2(%arg0: i32, %arg1: i32, %arg2: i32) -> (i32, i32) {
    %c0_i32 = arith.constant 0 : i32
    %c0_i32_0 = arith.constant 0 : i32
    return %c0_i32, %arg1 : i32, i32
  }
  func.func @transform_3(%arg0: i32, %arg1: i32, %arg2: i32) -> (i32, i32) {
    %c0_i32 = arith.constant 0 : i32
    return %arg0, %arg1 : i32, i32
  }
}

</mosaic_0001>

<llo_original>
// kernel: tpu_custom_call.1
$region0: #{tpu_custom_call.1}
  #allocation0 [shape = 'u32[]', space=smem, size = 0x4, offset = 0x4, fixed_abs, tag = 'smem constant byte address 0x4 - core index']
  #allocation1 [shape = 'u32[144,128]{1,0:T(1,128)}', space=vmem, size = 0x12000, scoped, tag = 'internal scratch']
  %s0 = inlined_call_operand.hbm [shape: bf16[8,1024], index: 0, kind: input, shape index: {}]
  %s1 = inlined_call_operand.hbm [shape: bf16[1024,128], index: 1, kind: input, shape index: {}]
  %s2 = inlined_call_operand.vmem [shape: f32[1,128], index: 2, kind: input, shape index: {}]
  %s3 = inlined_call_operand.hbm [shape: f32[8,128], index: 3, kind: output, shape index: {}]
  %s4 = sld [smem:[#allocation0]]
  $region34: #{tpu_custom_call.1} parent=0
    _
  %s6 = ssub.s32 1, %s4
  %s7 = scalar_select 0, %s6, %s4
  $region1: #{tpu_custom_call.1} parent=0
    #allocation2 [shape = 'u8[16384]{0}', space=vmem, size = 0x4000, scoped, tag = 'input window, operand 0, single buffered']
    #allocation3 [shape = 's32[1]{0}', space=sflag, size = 0x4, scoped, tag = 'scoped memory for tpu_custom_call.1']
    #allocation4 [shape = 's32[1]{0}', space=sflag, size = 0x4, scoped, tag = 'scoped memory for tpu_custom_call.1']
    #allocation5 [shape = 'u8[262144]{0}', space=vmem, size = 0x40000, scoped, tag = 'input window, operand 1, single buffered']
    #allocation6 [shape = 's32[1]{0}', space=sflag, size = 0x4, scoped, tag = 'scoped memory for tpu_custom_call.1']
    #allocation7 [shape = 'u8[4096]{0}', space=vmem, size = 0x1000, scoped, tag = 'output window, operand 0, single buffered']
    %8 = vsyncpa [#allocation3], 0
    %9 = vsyncpa [#allocation6], 0
    %10 = vsyncpa [#allocation4], 0
    // Predicated region
    $region2: #{tpu_custom_call.1} parent=1 // pred_check
      _
    $region3: #{tpu_custom_call.1} parent=1 // pred_check_branch
      %12 = sbr.rel (0) target = $region5
    $region4: #{tpu_custom_call.1} parent=1 // pred_region
      %s14 = ssub.s32 512, 512
      %15 = vsyncadd [#allocation3], %s14
      %s17 = sshll.u32 [#allocation2], 4
      %s18 = int_to_ptr.vmem [resolvable:$true] %s17
      %20 = dma.hbm_to_vmem [thread:$0]  %s0, 512, %s18, [#allocation3]
    $region5: #{tpu_custom_call.1} parent=1 // pred_fallthru
      _
    // Predicated region
    $region6: #{tpu_custom_call.1} parent=1 // pred_check
      _
    $region7: #{tpu_custom_call.1} parent=1 // pred_check_branch
      %22 = sbr.rel (0) target = $region9
    $region8: #{tpu_custom_call.1} parent=1 // pred_region
      %s24 = ssub.s32 8192, 8192
      %25 = vsyncadd [#allocation6], %s24
      %s26 = sshll.u32 [#allocation5], 4
      %s27 = int_to_ptr.vmem [resolvable:$true] %s26
      %32 = dma.hbm_to_vmem [thread:$0]  %s1, 8192, %s27, [#allocation6], 64, 64, 4
    $region9: #{tpu_custom_call.1} parent=1 // pred_fallthru
      _
    // Predicated region
    $region10: #{tpu_custom_call.1} parent=1 // pred_check
      _
    $region11: #{tpu_custom_call.1} parent=1 // pred_check_branch
      %34 = sbr.rel (0) target = $region13
    $region12: #{tpu_custom_call.1} parent=1 // pred_region
      _
    $region13: #{tpu_custom_call.1} parent=1 // pred_fallthru
      _
    // Predicated region
    $region14: #{tpu_custom_call.1} parent=1 // pred_check
      _
    $region15: #{tpu_custom_call.1} parent=1 // pred_check_branch
      %36 = sbr.rel (0) target = $region17
    $region16: #{tpu_custom_call.1} parent=1 // pred_region
      %37 = dma.done [#allocation3], 512
    $region17: #{tpu_custom_call.1} parent=1 // pred_fallthru
      _
    // Predicated region
    $region18: #{tpu_custom_call.1} parent=1 // pred_check
      _
    $region19: #{tpu_custom_call.1} parent=1 // pred_check_branch
      %39 = sbr.rel (0) target = $region21
    $region20: #{tpu_custom_call.1} parent=1 // pred_region
      %40 = dma.done [#allocation6], 8192
    $region21: #{tpu_custom_call.1} parent=1 // pred_fallthru
      _
    %p42 = scmp.eq.s32.totalorder 0, 0
    // Predicated region
    $region22: #{tpu_custom_call.1} parent=1 // pred_check
      %p43 = pneg %p42
    $region23: #{tpu_custom_call.1} parent=1 // pred_check_branch
      %45 = sbr.rel (%p43) target = $region25
    $region24: #{tpu_custom_call.1} parent=1 // pred_region
      %v46 = vld [vmem:[%s2] sm:$0x1]
      %v48 = vlaneseq
      %v49 = vshrl.u32 %v48, 7
      %v50 = vsub.s32 0, %v49
      %v51 = vrot.slane %v46, %v50
      %53 = vst [vmem:[#allocation7] sm:$0xff] %v51
    $region25: #{tpu_custom_call.1} parent=1 // pred_fallthru
      _
    %v54 = vld [vmem:[#allocation7] sm:$0xff]
    %v55 = vld [vmem:[#allocation2] sm:$0xff]
    %v56 = vld [vmem:[#allocation2 + $0x8] sm:$0xff]
    %v57 = vld [vmem:[#allocation2 + $0x10] sm:$0xff]
    %v58 = vld [vmem:[#allocation2 + $0x18] sm:$0xff]
    %v59 = vld [vmem:[#allocation5] sm:$0xf]
    %v60 = vld [vmem:[#allocation5 + $0x4] sm:$0xf]
    %v61 = vld [vmem:[#allocation5 + $0x8] sm:$0xf]
    %v62 = vld [vmem:[#allocation5 + $0xc] sm:$0xf]
    %v63 = vld [vmem:[#allocation5 + $0x10] sm:$0xf]
    %v64 = vld [vmem:[#allocation5 + $0x14] sm:$0xf]
    %v65 = vld [vmem:[#allocation5 + $0x18] sm:$0xf]
    %v66 = vld [vmem:[#allocation5 + $0x1c] sm:$0xf]
    %v67 = vld [vmem:[#allocation5 + $0x20] sm:$0xf]
    %v68 = vld [vmem:[#allocation5 + $0x24] sm:$0xf]
    %v69 = vld [vmem:[#allocation5 + $0x28] sm:$0xf]
    %v70 = vld [vmem:[#allocation5 + $0x2c] sm:$0xf]
    %v71 = vld [vmem:[#allocation5 + $0x30] sm:$0xf]
    %v72 = vld [vmem:[#allocation5 + $0x34] sm:$0xf]
    %v73 = vld [vmem:[#allocation5 + $0x38] sm:$0xf]
    %v74 = vld [vmem:[#allocation5 + $0x3c] sm:$0xf]
    %v75 = vld [vmem:[#allocation5 + $0x40] sm:$0xf]
    %v76 = vld [vmem:[#allocation5 + $0x44] sm:$0xf]
    %v77 = vld [vmem:[#allocation5 + $0x48] sm:$0xf]
    %v78 = vld [vmem:[#allocation5 + $0x4c] sm:$0xf]
    %v79 = vld [vmem:[#allocation5 + $0x50] sm:$0xf]
    %v80 = vld [vmem:[#allocation5 + $0x54] sm:$0xf]
    %v81 = vld [vmem:[#allocation5 + $0x58] sm:$0xf]
    %v82 = vld [vmem:[#allocation5 + $0x5c] sm:$0xf]
    %v83 = vld [vmem:[#allocation5 + $0x60] sm:$0xf]
    %v84 = vld [vmem:[#allocation5 + $0x64] sm:$0xf]
    %v85 = vld [vmem:[#allocation5 + $0x68] sm:$0xf]
    %v86 = vld [vmem:[#allocation5 + $0x6c] sm:$0xf]
    %v87 = vld [vmem:[#allocation5 + $0x70] sm:$0xf]
    %v88 = vld [vmem:[#allocation5 + $0x74] sm:$0xf]
    %v89 = vld [vmem:[#allocation5 + $0x78] sm:$0xf]
    %v90 = vld [vmem:[#allocation5 + $0x7c] sm:$0xf]
    %v91 = vld [vmem:[#allocation5 + $0x80] sm:$0xf]
    %v92 = vld [vmem:[#allocation5 + $0x84] sm:$0xf]
    %v93 = vld [vmem:[#allocation5 + $0x88] sm:$0xf]
    %v94 = vld [vmem:[#allocation5 + $0x8c] sm:$0xf]
    %v95 = vld [vmem:[#allocation5 + $0x90] sm:$0xf]
    %v96 = vld [vmem:[#allocation5 + $0x94] sm:$0xf]
    %v97 = vld [vmem:[#allocation5 + $0x98] sm:$0xf]
    %v98 = vld [vmem:[#allocation5 + $0x9c] sm:$0xf]
    %v99 = vld [vmem:[#allocation5 + $0xa0] sm:$0xf]
    %v100 = vld [vmem:[#allocation5 + $0xa4] sm:$0xf]
    %v101 = vld [vmem:[#allocation5 + $0xa8] sm:$0xf]
    %v102 = vld [vmem:[#allocation5 + $0xac] sm:$0xf]
    %v103 = vld [vmem:[#allocation5 + $0xb0] sm:$0xf]
    %v104 = vld [vmem:[#allocation5 + $0xb4] sm:$0xf]
    %v105 = vld [vmem:[#allocation5 + $0xb8] sm:$0xf]
    %v106 = vld [vmem:[#allocation5 + $0xbc] sm:$0xf]
    %v107 = vld [vmem:[#allocation5 + $0xc0] sm:$0xf]
    %v108 = vld [vmem:[#allocation5 + $0xc4] sm:$0xf]
    %v109 = vld [vmem:[#allocation5 + $0xc8] sm:$0xf]
    %v110 = vld [vmem:[#allocation5 + $0xcc] sm:$0xf]
    %v111 = vld [vmem:[#allocation5 + $0xd0] sm:$0xf]
    %v112 = vld [vmem:[#allocation5 + $0xd4] sm:$0xf]
    %v113 = vld [vmem:[#allocation5 + $0xd8] sm:$0xf]
    %v114 = vld [vmem:[#allocation5 + $0xdc] sm:$0xf]
    %v115 = vld [vmem:[#allocation5 + $0xe0] sm:$0xf]
    %v116 = vld [vmem:[#allocation5 + $0xe4] sm:$0xf]
    %v117 = vld [vmem:[#allocation5 + $0xe8] sm:$0xf]
    %v118 = vld [vmem:[#allocation5 + $0xec] sm:$0xf]
    %v119 = vld [vmem:[#allocation5 + $0xf0] sm:$0xf]
    %v120 = vld [vmem:[#allocation5 + $0xf4] sm:$0xf]
    %v121 = vld [vmem:[#allocation5 + $0xf8] sm:$0xf]
    %v122 = vld [vmem:[#allocation5 + $0xfc] sm:$0xf]
    %v123 = vld [vmem:[#allocation5 + $0x100] sm:$0xf]
    %v124 = vld [vmem:[#allocation5 + $0x104] sm:$0xf]
    %v125 = vld [vmem:[#allocation5 + $0x108] sm:$0xf]
    %v126 = vld [vmem:[#allocation5 + $0x10c] sm:$0xf]
    %v127 = vld [vmem:[#allocation5 + $0x110] sm:$0xf]
    %v128 = vld [vmem:[#allocation5 + $0x114] sm:$0xf]
    %v129 = vld [vmem:[#allocation5 + $0x118] sm:$0xf]
    %v130 = vld [vmem:[#allocation5 + $0x11c] sm:$0xf]
    %v131 = vld [vmem:[#allocation5 + $0x120] sm:$0xf]
    %v132 = vld [vmem:[#allocation5 + $0x124] sm:$0xf]
    %v133 = vld [vmem:[#allocation5 + $0x128] sm:$0xf]
    %v134 = vld [vmem:[#allocation5 + $0x12c] sm:$0xf]
    %v135 = vld [vmem:[#allocation5 + $0x130] sm:$0xf]
    %v136 = vld [vmem:[#allocation5 + $0x134] sm:$0xf]
    %v137 = vld [vmem:[#allocation5 + $0x138] sm:$0xf]
    %v138 = vld [vmem:[#allocation5 + $0x13c] sm:$0xf]
    %v139 = vld [vmem:[#allocation5 + $0x140] sm:$0xf]
    %v140 = vld [vmem:[#allocation5 + $0x144] sm:$0xf]
    %v141 = vld [vmem:[#allocation5 + $0x148] sm:$0xf]
    %v142 = vld [vmem:[#allocation5 + $0x14c] sm:$0xf]
    %v143 = vld [vmem:[#allocation5 + $0x150] sm:$0xf]
    %v144 = vld [vmem:[#allocation5 + $0x154] sm:$0xf]
    %v145 = vld [vmem:[#allocation5 + $0x158] sm:$0xf]
    %v146 = vld [vmem:[#allocation5 + $0x15c] sm:$0xf]
    %v147 = vld [vmem:[#allocation5 + $0x160] sm:$0xf]
    %v148 = vld [vmem:[#allocation5 + $0x164] sm:$0xf]
    %v149 = vld [vmem:[#allocation5 + $0x168] sm:$0xf]
    %v150 = vld [vmem:[#allocation5 + $0x16c] sm:$0xf]
    %v151 = vld [vmem:[#allocation5 + $0x170] sm:$0xf]
    %v152 = vld [vmem:[#allocation5 + $0x174] sm:$0xf]
    %v153 = vld [vmem:[#allocation5 + $0x178] sm:$0xf]
    %v154 = vld [vmem:[#allocation5 + $0x17c] sm:$0xf]
    %v155 = vld [vmem:[#allocation5 + $0x180] sm:$0xf]
    %v156 = vld [vmem:[#allocation5 + $0x184] sm:$0xf]
    %v157 = vld [vmem:[#allocation5 + $0x188] sm:$0xf]
    %v158 = vld [vmem:[#allocation5 + $0x18c] sm:$0xf]
    %v159 = vld [vmem:[#allocation5 + $0x190] sm:$0xf]
    %v160 = vld [vmem:[#allocation5 + $0x194] sm:$0xf]
    %v161 = vld [vmem:[#allocation5 + $0x198] sm:$0xf]
    %v162 = vld [vmem:[#allocation5 + $0x19c] sm:$0xf]
    %v163 = vld [vmem:[#allocation5 + $0x1a0] sm:$0xf]
    %v164 = vld [vmem:[#allocation5 + $0x1a4] sm:$0xf]
    %v165 = vld [vmem:[#allocation5 + $0x1a8] sm:$0xf]
    %v166 = vld [vmem:[#allocation5 + $0x1ac] sm:$0xf]
    %v167 = vld [vmem:[#allocation5 + $0x1b0] sm:$0xf]
    %v168 = vld [vmem:[#allocation5 + $0x1b4] sm:$0xf]
    %v169 = vld [vmem:[#allocation5 + $0x1b8] sm:$0xf]
    %v170 = vld [vmem:[#allocation5 + $0x1bc] sm:$0xf]
    %v171 = vld [vmem:[#allocation5 + $0x1c0] sm:$0xf]
    %v172 = vld [vmem:[#allocation5 + $0x1c4] sm:$0xf]
    %v173 = vld [vmem:[#allocation5 + $0x1c8] sm:$0xf]
    %v174 = vld [vmem:[#allocation5 + $0x1cc] sm:$0xf]
    %v175 = vld [vmem:[#allocation5 + $0x1d0] sm:$0xf]
    %v176 = vld [vmem:[#allocation5 + $0x1d4] sm:$0xf]
    %v177 = vld [vmem:[#allocation5 + $0x1d8] sm:$0xf]
    %v178 = vld [vmem:[#allocation5 + $0x1dc] sm:$0xf]
    %v179 = vld [vmem:[#allocation5 + $0x1e0] sm:$0xf]
    %v180 = vld [vmem:[#allocation5 + $0x1e4] sm:$0xf]
    %v181 = vld [vmem:[#allocation5 + $0x1e8] sm:$0xf]
    %v182 = vld [vmem:[#allocation5 + $0x1ec] sm:$0xf]
    %v183 = vld [vmem:[#allocation5 + $0x1f0] sm:$0xf]
    %v184 = vld [vmem:[#allocation5 + $0x1f4] sm:$0xf]
    %v185 = vld [vmem:[#allocation5 + $0x1f8] sm:$0xf]
    %v186 = vld [vmem:[#allocation5 + $0x1fc] sm:$0xf]
    %v191 = vunpack.c.l.b16 %v55
    %v192 = vunpack.c.h.b16 %v55
    %v193 = vunpack.c.l.b16 %v56
    %v194 = vunpack.c.h.b16 %v56
    %v195 = vunpack.c.l.b16 %v57
    %v196 = vunpack.c.h.b16 %v57
    %v197 = vunpack.c.l.b16 %v58
    %v198 = vunpack.c.h.b16 %v58
    %v199 = vpack.c.b16 %v191, %v191
    %v200 = vpack.c.b16 %v192, %v192
    %v201 = vpack.c.b16 %v193, %v193
    %v202 = vpack.c.b16 %v194, %v194
    %v203 = vpack.c.b16 %v195, %v195
    %v204 = vpack.c.b16 %v196, %v196
    %v205 = vpack.c.b16 %v197, %v197
    %v206 = vpack.c.b16 %v198, %v198
    %v343 = vunpack.c.l.b16 %v59
    %v344 = vunpack.c.l.b16 %v60
    %v345 = vunpack.c.l.b16 %v61
    %v346 = vunpack.c.l.b16 %v62
    %v347 = vunpack.c.l.b16 %v63
    %v348 = vunpack.c.l.b16 %v64
    %v349 = vunpack.c.l.b16 %v65
    %v350 = vunpack.c.l.b16 %v66
    %v351 = vunpack.c.l.b16 %v67
    %v352 = vunpack.c.l.b16 %v68
    %v353 = vunpack.c.l.b16 %v69
    %v354 = vunpack.c.l.b16 %v70
    %v355 = vunpack.c.l.b16 %v71
    %v356 = vunpack.c.l.b16 %v72
    %v357 = vunpack.c.l.b16 %v73
    %v358 = vunpack.c.l.b16 %v74
    %v359 = vunpack.c.l.b16 %v75
    %v360 = vunpack.c.l.b16 %v76
    %v361 = vunpack.c.l.b16 %v77
    %v362 = vunpack.c.l.b16 %v78
    %v363 = vunpack.c.l.b16 %v79
    %v364 = vunpack.c.l.b16 %v80
    %v365 = vunpack.c.l.b16 %v81
    %v366 = vunpack.c.l.b16 %v82
    %v367 = vunpack.c.l.b16 %v83
    %v368 = vunpack.c.l.b16 %v84
    %v369 = vunpack.c.l.b16 %v85
    %v370 = vunpack.c.l.b16 %v86
    %v371 = vunpack.c.l.b16 %v87
    %v372 = vunpack.c.l.b16 %v88
    %v373 = vunpack.c.l.b16 %v89
    %v374 = vunpack.c.l.b16 %v90
    %v375 = vunpack.c.l.b16 %v91
    %v376 = vunpack.c.l.b16 %v92
    %v377 = vunpack.c.l.b16 %v93
    %v378 = vunpack.c.l.b16 %v94
    %v379 = vunpack.c.l.b16 %v95
    %v380 = vunpack.c.l.b16 %v96
    %v381 = vunpack.c.l.b16 %v97
    %v382 = vunpack.c.l.b16 %v98
    %v383 = vunpack.c.l.b16 %v99
    %v384 = vunpack.c.l.b16 %v100
    %v385 = vunpack.c.l.b16 %v101
    %v386 = vunpack.c.l.b16 %v102
    %v387 = vunpack.c.l.b16 %v103
    %v388 = vunpack.c.l.b16 %v104
    %v389 = vunpack.c.l.b16 %v105
    %v390 = vunpack.c.l.b16 %v106
    %v391 = vunpack.c.l.b16 %v107
    %v392 = vunpack.c.l.b16 %v108
    %v393 = vunpack.c.l.b16 %v109
    %v394 = vunpack.c.l.b16 %v110
    %v395 = vunpack.c.l.b16 %v111
    %v396 = vunpack.c.l.b16 %v112
    %v397 = vunpack.c.l.b16 %v113
    %v398 = vunpack.c.l.b16 %v114
    %v399 = vunpack.c.l.b16 %v115
    %v400 = vunpack.c.l.b16 %v116
    %v401 = vunpack.c.l.b16 %v117
    %v402 = vunpack.c.l.b16 %v118
    %v403 = vunpack.c.l.b16 %v119
    %v404 = vunpack.c.l.b16 %v120
    %v405 = vunpack.c.l.b16 %v121
    %v406 = vunpack.c.l.b16 %v122
    %v407 = vunpack.c.l.b16 %v123
    %v408 = vunpack.c.l.b16 %v124
    %v409 = vunpack.c.l.b16 %v125
    %v410 = vunpack.c.l.b16 %v126
    %v411 = vunpack.c.l.b16 %v127
    %v412 = vunpack.c.l.b16 %v128
    %v413 = vunpack.c.l.b16 %v129
    %v414 = vunpack.c.l.b16 %v130
    %v415 = vunpack.c.l.b16 %v131
    %v416 = vunpack.c.l.b16 %v132
    %v417 = vunpack.c.l.b16 %v133
    %v418 = vunpack.c.l.b16 %v134
    %v419 = vunpack.c.l.b16 %v135
    %v420 = vunpack.c.l.b16 %v136
    %v421 = vunpack.c.l.b16 %v137
    %v422 = vunpack.c.l.b16 %v138
    %v423 = vunpack.c.l.b16 %v139
    %v424 = vunpack.c.l.b16 %v140
    %v425 = vunpack.c.l.b16 %v141
    %v426 = vunpack.c.l.b16 %v142
    %v427 = vunpack.c.l.b16 %v143
    %v428 = vunpack.c.l.b16 %v144
    %v429 = vunpack.c.l.b16 %v145
    %v430 = vunpack.c.l.b16 %v146
    %v431 = vunpack.c.l.b16 %v147
    %v432 = vunpack.c.l.b16 %v148
    %v433 = vunpack.c.l.b16 %v149
    %v434 = vunpack.c.l.b16 %v150
    %v435 = vunpack.c.l.b16 %v151
    %v436 = vunpack.c.l.b16 %v152
    %v437 = vunpack.c.l.b16 %v153
    %v438 = vunpack.c.l.b16 %v154
    %v439 = vunpack.c.l.b16 %v155
    %v440 = vunpack.c.l.b16 %v156
    %v441 = vunpack.c.l.b16 %v157
    %v442 = vunpack.c.l.b16 %v158
    %v443 = vunpack.c.l.b16 %v159
    %v444 = vunpack.c.l.b16 %v160
    %v445 = vunpack.c.l.b16 %v161
    %v446 = vunpack.c.l.b16 %v162
    %v447 = vunpack.c.l.b16 %v163
    %v448 = vunpack.c.l.b16 %v164
    %v449 = vunpack.c.l.b16 %v165
    %v450 = vunpack.c.l.b16 %v166
    %v451 = vunpack.c.l.b16 %v167
    %v452 = vunpack.c.l.b16 %v168
    %v453 = vunpack.c.l.b16 %v169
    %v454 = vunpack.c.l.b16 %v170
    %v455 = vunpack.c.l.b16 %v171
    %v456 = vunpack.c.l.b16 %v172
    %v457 = vunpack.c.l.b16 %v173
    %v458 = vunpack.c.l.b16 %v174
    %v459 = vunpack.c.l.b16 %v175
    %v460 = vunpack.c.l.b16 %v176
    %v461 = vunpack.c.l.b16 %v177
    %v462 = vunpack.c.l.b16 %v178
    %v463 = vunpack.c.l.b16 %v179
    %v464 = vunpack.c.l.b16 %v180
    %v465 = vunpack.c.l.b16 %v181
    %v466 = vunpack.c.l.b16 %v182
    %v467 = vunpack.c.l.b16 %v183
    %v468 = vunpack.c.l.b16 %v184
    %v469 = vunpack.c.l.b16 %v185
    %v470 = vunpack.c.l.b16 %v186
    %v471 = vpack.c.b16 %v344, %v343
    %v472 = vpack.c.b16 %v346, %v345
    %v473 = vpack.c.b16 %v348, %v347
    %v474 = vpack.c.b16 %v350, %v349
    %v475 = vpack.c.b16 %v352, %v351
    %v476 = vpack.c.b16 %v354, %v353
    %v477 = vpack.c.b16 %v356, %v355
    %v478 = vpack.c.b16 %v358, %v357
    %v479 = vpack.c.b16 %v360, %v359
    %v480 = vpack.c.b16 %v362, %v361
    %v481 = vpack.c.b16 %v364, %v363
    %v482 = vpack.c.b16 %v366, %v365
    %v483 = vpack.c.b16 %v368, %v367
    %v484 = vpack.c.b16 %v370, %v369
    %v485 = vpack.c.b16 %v372, %v371
    %v486 = vpack.c.b16 %v374, %v373
    %v487 = vpack.c.b16 %v376, %v375
    %v488 = vpack.c.b16 %v378, %v377
    %v489 = vpack.c.b16 %v380, %v379
    %v490 = vpack.c.b16 %v382, %v381
    %v491 = vpack.c.b16 %v384, %v383
    %v492 = vpack.c.b16 %v386, %v385
    %v493 = vpack.c.b16 %v388, %v387
    %v494 = vpack.c.b16 %v390, %v389
    %v495 = vpack.c.b16 %v392, %v391
    %v496 = vpack.c.b16 %v394, %v393
    %v497 = vpack.c.b16 %v396, %v395
    %v498 = vpack.c.b16 %v398, %v397
    %v499 = vpack.c.b16 %v400, %v399
    %v500 = vpack.c.b16 %v402, %v401
    %v501 = vpack.c.b16 %v404, %v403
    %v502 = vpack.c.b16 %v406, %v405
    %v503 = vpack.c.b16 %v408, %v407
    %v504 = vpack.c.b16 %v410, %v409
    %v505 = vpack.c.b16 %v412, %v411
    %v506 = vpack.c.b16 %v414, %v413
    %v507 = vpack.c.b16 %v416, %v415
    %v508 = vpack.c.b16 %v418, %v417
    %v509 = vpack.c.b16 %v420, %v419
    %v510 = vpack.c.b16 %v422, %v421
    %v511 = vpack.c.b16 %v424, %v423
    %v512 = vpack.c.b16 %v426, %v425
    %v513 = vpack.c.b16 %v428, %v427
    %v514 = vpack.c.b16 %v430, %v429
    %v515 = vpack.c.b16 %v432, %v431
    %v516 = vpack.c.b16 %v434, %v433
    %v517 = vpack.c.b16 %v436, %v435
    %v518 = vpack.c.b16 %v438, %v437
    %v519 = vpack.c.b16 %v440, %v439
    %v520 = vpack.c.b16 %v442, %v441
    %v521 = vpack.c.b16 %v444, %v443
    %v522 = vpack.c.b16 %v446, %v445
    %v523 = vpack.c.b16 %v448, %v447
    %v524 = vpack.c.b16 %v450, %v449
    %v525 = vpack.c.b16 %v452, %v451
    %v526 = vpack.c.b16 %v454, %v453
    %v527 = vpack.c.b16 %v456, %v455
    %v528 = vpack.c.b16 %v458, %v457
    %v529 = vpack.c.b16 %v460, %v459
    %v530 = vpack.c.b16 %v462, %v461
    %v531 = vpack.c.b16 %v464, %v463
    %v532 = vpack.c.b16 %v466, %v465
    %v533 = vpack.c.b16 %v468, %v467
    %v534 = vpack.c.b16 %v470, %v469
    %599 = vmatprep.subr.bf16.mxu0 0
    %600 = vmatpush1.bf16.msra.mxu0 %v471
    %601 = vmatprep.subr.bf16.mxu0 0
    %602 = vmatpush1.bf16.msra.mxu0 %v472
    %603 = vmatprep.subr.bf16.mxu0 0
    %604 = vmatpush1.bf16.msra.mxu0 %v473
    %605 = vmatprep.subr.bf16.mxu0 0
    %606 = vmatpush1.bf16.msra.mxu0 %v474
    %607 = vmatprep.subr.bf16.mxu0 0
    %608 = vmatpush1.bf16.msra.mxu0 %v475
    %609 = vmatprep.subr.bf16.mxu0 0
    %610 = vmatpush1.bf16.msra.mxu0 %v476
    %611 = vmatprep.subr.bf16.mxu0 0
    %612 = vmatpush1.bf16.msra.mxu0 %v477
    %613 = vmatprep.subr.bf16.mxu0 0
    %614 = vmatpush1.bf16.msra.mxu0 %v478
    %615 = vmatprep.subr.bf16.mxu0 0
    %616 = vmatpush1.bf16.msra.mxu0 %v479
    %617 = vmatprep.subr.bf16.mxu0 0
    %618 = vmatpush1.bf16.msra.mxu0 %v480
    %619 = vmatprep.subr.bf16.mxu0 0
    %620 = vmatpush1.bf16.msra.mxu0 %v481
    %621 = vmatprep.subr.bf16.mxu0 0
    %622 = vmatpush1.bf16.msra.mxu0 %v482
    %623 = vmatprep.subr.bf16.mxu0 0
    %624 = vmatpush1.bf16.msra.mxu0 %v483
    %625 = vmatprep.subr.bf16.mxu0 0
    %626 = vmatpush1.bf16.msra.mxu0 %v484
    %627 = vmatprep.subr.bf16.mxu0 0
    %628 = vmatpush1.bf16.msra.mxu0 %v485
    %629 = vmatprep.subr.bf16.mxu0 0
    %630 = vmatpush1.bf16.msra.mxu0 %v486
    %631 = vmatprep.mubr.bf16.mxu0 %v200
    %632 = vmatmul.mubr.bf16.gmra.mrb[0].mxu0 %v199
    %v633 = vpop.f32.mrb[0].mxu0
    %v634 = vadd.f32 0.0, %v633
    %v635 = vpop.f32.mrb[0].mxu0
    %v636 = vpop.f32.mrb[0].mxu0
    %v637 = vpop.f32.mrb[0].mxu0
    %638 = vdwg.mxu0
    %639 = vmatprep.subr.bf16.mxu0 0
    %640 = vmatpush1.bf16.msra.mxu0 %v487
    %641 = vmatprep.subr.bf16.mxu0 0
    %642 = vmatpush1.bf16.msra.mxu0 %v488
    %643 = vmatprep.subr.bf16.mxu0 0
    %644 = vmatpush1.bf16.msra.mxu0 %v489
    %645 = vmatprep.subr.bf16.mxu0 0
    %646 = vmatpush1.bf16.msra.mxu0 %v490
    %647 = vmatprep.subr.bf16.mxu0 0
    %648 = vmatpush1.bf16.msra.mxu0 %v491
    %649 = vmatprep.subr.bf16.mxu0 0
    %650 = vmatpush1.bf16.msra.mxu0 %v492
    %651 = vmatprep.subr.bf16.mxu0 0
    %652 = vmatpush1.bf16.msra.mxu0 %v493
    %653 = vmatprep.subr.bf16.mxu0 0
    %654 = vmatpush1.bf16.msra.mxu0 %v494
    %655 = vmatprep.subr.bf16.mxu0 0
    %656 = vmatpush1.bf16.msra.mxu0 %v495
    %657 = vmatprep.subr.bf16.mxu0 0
    %658 = vmatpush1.bf16.msra.mxu0 %v496
    %659 = vmatprep.subr.bf16.mxu0 0
    %660 = vmatpush1.bf16.msra.mxu0 %v497
    %661 = vmatprep.subr.bf16.mxu0 0
    %662 = vmatpush1.bf16.msra.mxu0 %v498
    %663 = vmatprep.subr.bf16.mxu0 0
    %664 = vmatpush1.bf16.msra.mxu0 %v499
    %665 = vmatprep.subr.bf16.mxu0 0
    %666 = vmatpush1.bf16.msra.mxu0 %v500
    %667 = vmatprep.subr.bf16.mxu0 0
    %668 = vmatpush1.bf16.msra.mxu0 %v501
    %669 = vmatprep.subr.bf16.mxu0 0
    %670 = vmatpush1.bf16.msra.mxu0 %v502
    %671 = vmatprep.mubr.bf16.mxu0 %v202
    %672 = vmatmul.mubr.bf16.gmra.mrb[0].mxu0 %v201
    %v673 = vpop.f32.mrb[0].mxu0
    %v674 = vadd.f32 %v634, %v673
    %v675 = vpop.f32.mrb[0].mxu0
    %v676 = vpop.f32.mrb[0].mxu0
    %v677 = vpop.f32.mrb[0].mxu0
    %678 = vdwg.mxu0
    %679 = vmatprep.subr.bf16.mxu0 0
    %680 = vmatpush1.bf16.msra.mxu0 %v503
    %681 = vmatprep.subr.bf16.mxu0 0
    %682 = vmatpush1.bf16.msra.mxu0 %v504
    %683 = vmatprep.subr.bf16.mxu0 0
    %684 = vmatpush1.bf16.msra.mxu0 %v505
    %685 = vmatprep.subr.bf16.mxu0 0
    %686 = vmatpush1.bf16.msra.mxu0 %v506
    %687 = vmatprep.subr.bf16.mxu0 0
    %688 = vmatpush1.bf16.msra.mxu0 %v507
    %689 = vmatprep.subr.bf16.mxu0 0
    %690 = vmatpush1.bf16.msra.mxu0 %v508
    %691 = vmatprep.subr.bf16.mxu0 0
    %692 = vmatpush1.bf16.msra.mxu0 %v509
    %693 = vmatprep.subr.bf16.mxu0 0
    %694 = vmatpush1.bf16.msra.mxu0 %v510
    %695 = vmatprep.subr.bf16.mxu0 0
    %696 = vmatpush1.bf16.msra.mxu0 %v511
    %697 = vmatprep.subr.bf16.mxu0 0
    %698 = vmatpush1.bf16.msra.mxu0 %v512
    %699 = vmatprep.subr.bf16.mxu0 0
    %700 = vmatpush1.bf16.msra.mxu0 %v513
    %701 = vmatprep.subr.bf16.mxu0 0
    %702 = vmatpush1.bf16.msra.mxu0 %v514
    %703 = vmatprep.subr.bf16.mxu0 0
    %704 = vmatpush1.bf16.msra.mxu0 %v515
    %705 = vmatprep.subr.bf16.mxu0 0
    %706 = vmatpush1.bf16.msra.mxu0 %v516
    %707 = vmatprep.subr.bf16.mxu0 0
    %708 = vmatpush1.bf16.msra.mxu0 %v517
    %709 = vmatprep.subr.bf16.mxu0 0
    %710 = vmatpush1.bf16.msra.mxu0 %v518
    %711 = vmatprep.mubr.bf16.mxu0 %v204
    %712 = vmatmul.mubr.bf16.gmra.mrb[0].mxu0 %v203
    %v713 = vpop.f32.mrb[0].mxu0
    %v714 = vadd.f32 %v674, %v713
    %v715 = vpop.f32.mrb[0].mxu0
    %v716 = vpop.f32.mrb[0].mxu0
    %v717 = vpop.f32.mrb[0].mxu0
    %718 = vdwg.mxu0
    %719 = vmatprep.subr.bf16.mxu0 0
    %720 = vmatpush1.bf16.msra.mxu0 %v519
    %721 = vmatprep.subr.bf16.mxu0 0
    %722 = vmatpush1.bf16.msra.mxu0 %v520
    %723 = vmatprep.subr.bf16.mxu0 0
    %724 = vmatpush1.bf16.msra.mxu0 %v521
    %725 = vmatprep.subr.bf16.mxu0 0
    %726 = vmatpush1.bf16.msra.mxu0 %v522
    %727 = vmatprep.subr.bf16.mxu0 0
    %728 = vmatpush1.bf16.msra.mxu0 %v523
    %729 = vmatprep.subr.bf16.mxu0 0
    %730 = vmatpush1.bf16.msra.mxu0 %v524
    %731 = vmatprep.subr.bf16.mxu0 0
    %732 = vmatpush1.bf16.msra.mxu0 %v525
    %733 = vmatprep.subr.bf16.mxu0 0
    %734 = vmatpush1.bf16.msra.mxu0 %v526
    %735 = vmatprep.subr.bf16.mxu0 0
    %736 = vmatpush1.bf16.msra.mxu0 %v527
    %737 = vmatprep.subr.bf16.mxu0 0
    %738 = vmatpush1.bf16.msra.mxu0 %v528
    %739 = vmatprep.subr.bf16.mxu0 0
    %740 = vmatpush1.bf16.msra.mxu0 %v529
    %741 = vmatprep.subr.bf16.mxu0 0
    %742 = vmatpush1.bf16.msra.mxu0 %v530
    %743 = vmatprep.subr.bf16.mxu0 0
    %744 = vmatpush1.bf16.msra.mxu0 %v531
    %745 = vmatprep.subr.bf16.mxu0 0
    %746 = vmatpush1.bf16.msra.mxu0 %v532
    %747 = vmatprep.subr.bf16.mxu0 0
    %748 = vmatpush1.bf16.msra.mxu0 %v533
    %749 = vmatprep.subr.bf16.mxu0 0
    %750 = vmatpush1.bf16.msra.mxu0 %v534
    %751 = vmatprep.mubr.bf16.mxu0 %v206
    %752 = vmatmul.mubr.bf16.gmra.mrb[0].mxu0 %v205
    %v753 = vpop.f32.mrb[0].mxu0
    %v754 = vadd.f32 %v714, %v753
    %v755 = vpop.f32.mrb[0].mxu0
    %v756 = vpop.f32.mrb[0].mxu0
    %v757 = vpop.f32.mrb[0].mxu0
    %758 = vdwg.mxu0
    %v759 = vadd.f32 %v54, %v754
    %760 = vst [vmem:[#allocation7] sm:$0xff] %v759
    // Predicated region
    $region26: #{tpu_custom_call.1} parent=1 // pred_check
      _
    $region27: #{tpu_custom_call.1} parent=1 // pred_check_branch
      %762 = sbr.rel (0) target = $region29
    $region28: #{tpu_custom_call.1} parent=1 // pred_region
      %s764 = ssub.s32 128, 128
      %765 = vsyncadd [#allocation4], %s764
      %s767 = sshll.u32 [#allocation7], 4
      %s768 = int_to_ptr.vmem [resolvable:$true] %s767
      %770 = dma.vmem_to_hbm [thread:$0]  %s768, 128, %s3, [#allocation4]
    $region29: #{tpu_custom_call.1} parent=1 // pred_fallthru
      _
    // Predicated region
    $region30: #{tpu_custom_call.1} parent=1 // pred_check
      _
    $region31: #{tpu_custom_call.1} parent=1 // pred_check_branch
      %772 = sbr.rel (0) target = $region33
    $region32: #{tpu_custom_call.1} parent=1 // pred_region
      %773 = dma.done [#allocation4], 128
    $region33: #{tpu_custom_call.1} parent=1 // pred_fallthru
      _
    %774 = vsyncpa [#allocation3], 1
    %775 = vsyncpa [#allocation6], 1
    %776 = vsyncpa [#allocation4], 1

</llo_original>
